<compile_context>
chip_gen: v7x
topology: tpu7x:2x2x1
jax: 0.10.0
libtpu: 0.0.40
codegen_flags: <defaults>
</compile_context>

<pallas_src>
import functools

import jax
import jax.numpy as jnp
from jax.experimental import pallas as pl
from jax.experimental.pallas import tpu as pltpu


def _mapping_kernel(x_ref, w0_ref, wr_ref, b_ref, out_ref, *,
                    n_layers, compute_dtype):
    """One batch tile.

    x_ref : [TILE_B, z_dim]
    w0_ref: [z_dim, w_dim]            (scale already folded in)
    wr_ref: [n_layers-1, w_dim, w_dim] (scale already folded in)
    b_ref : [n_layers, w_dim]
    out_ref: [TILE_B, w_dim]
    """
    x = x_ref[...].astype(jnp.float32)

    # PixelNorm over the feature dim (dim=1). rsqrt -> EUP slot.
    mean_sq = jnp.mean(x * x, axis=1, keepdims=True)
    h = x * jax.lax.rsqrt(mean_sq + 1e-8)

    def layer(h, w, b_row, relu):
        y = jnp.dot(h.astype(compute_dtype), w.astype(compute_dtype),
                    preferred_element_type=jnp.float32)
        y = y + b_row.astype(jnp.float32)           # [1, w_dim] broadcast
        if relu:
            y = jnp.maximum(y, 0.0)
        return y

    # Layer 0 (z_dim -> w_dim), ReLU after.
    h = layer(h, w0_ref[...], b_ref[0:1, :], True)
    # Layers 1..n_layers-1 (w_dim -> w_dim); no ReLU after the last.
    for i in range(1, n_layers):
        h = layer(h, wr_ref[i - 1], b_ref[i:i + 1, :], i < n_layers - 1)

    out_ref[...] = h.astype(out_ref.dtype)


def mapping_network_pallas(x, weights, biases, *, tile_b=512,
                           compute_dtype=jnp.float32):
    """x: [B, z_dim]; weights[i]: [in_i, out_i] (already transposed, UNscaled);
    biases[i]: [out_i] or [1, out_i]. Returns [B, w_dim]."""
    B, z_dim = x.shape
    n_layers = len(weights)
    assert n_layers >= 2
    w_dim = weights[-1].shape[1]

    # Fold the WSLinear scales into the weights once (wrapper-side).
    scale0 = (2.0 / z_dim) ** 0.5
    scale = (2.0 / w_dim) ** 0.5
    w0 = (weights[0] * scale0).astype(jnp.float32)                    # [z_dim, w_dim]
    w_rest = jnp.stack([w * scale for w in weights[1:]], axis=0)      # [L-1, w_dim, w_dim]
    w_rest = w_rest.astype(jnp.float32)
    b_all = jnp.stack([jnp.reshape(b, (w_dim,)) for b in biases], 0)  # [L, w_dim]
    b_all = b_all.astype(jnp.float32)

    # Batch tiling: tile must be a multiple of 8 (sublane); pad B with zero
    # rows (zero rows produce finite values and are sliced off afterwards).
    tile = min(tile_b, ((B + 7) // 8) * 8)
    grid = pl.cdiv(B, tile)
    b_pad = grid * tile
    if b_pad != B:
        x = jnp.pad(x, ((0, b_pad - B), (0, 0)))

    kernel = functools.partial(_mapping_kernel, n_layers=n_layers,
                               compute_dtype=compute_dtype)

    out = pl.pallas_call(
        kernel,
        out_shape=jax.ShapeDtypeStruct((b_pad, w_dim), x.dtype),
        grid=(grid,),
        in_specs=[
            pl.BlockSpec((tile, z_dim), lambda i: (i, 0)),                 # x tile
            pl.BlockSpec((z_dim, w_dim), lambda i: (0, 0)),                # w0 (resident)
            pl.BlockSpec((n_layers - 1, w_dim, w_dim), lambda i: (0, 0, 0)),  # w_rest (resident)
            pl.BlockSpec((n_layers, w_dim), lambda i: (0, 0)),             # biases (resident)
        ],
        out_specs=pl.BlockSpec((tile, w_dim), lambda i: (i, 0)),
        compiler_params=pltpu.CompilerParams(
            dimension_semantics=("parallel",),
            vmem_limit_bytes=64 * 1024 * 1024,
        ),
    )(x, w0, w_rest, b_all)

    if b_pad != B:
        out = out[:B]
    return out


def mapping_network_ref(x, weights, biases, z_dim, w_dim):
    """Pure-JAX reference mirroring the PyTorch module (unfolded scales)."""
    x = x.astype(jnp.float32)
    h = x / jnp.sqrt(jnp.mean(x * x, axis=1, keepdims=True) + 1e-8)
    scales = [(2.0 / z_dim) ** 0.5] + [(2.0 / w_dim) ** 0.5] * (len(weights) - 1)
    for i, (w, b) in enumerate(zip(weights, biases)):
        h = (h * scales[i]) @ w + jnp.reshape(b, (1, -1))
        if i < len(weights) - 1:
            h = jnp.maximum(h, 0.0)
    return h


if __name__ == "__main__":
    key = jax.random.PRNGKey(0)

    B = 8
    z_dim = 32
    w_dim = 32
    n_layers = 8

    key, xk = jax.random.split(key)
    x = jax.random.normal(xk, (B, z_dim), dtype=jnp.float32)

    # Deterministic parameter init matching WSLinear.__init__:
    #   weight ~ N(0, 1) (PyTorch shape [out, in] -> stored transposed [in, out])
    #   bias = zeros
    weights = []
    biases = []
    in_dims = [z_dim] + [w_dim] * (n_layers - 1)
    out_dims = [w_dim] * n_layers
    for din, dout in zip(in_dims, out_dims):
        key, wk = jax.random.split(key)
        w_pt = jax.random.normal(wk, (dout, din), dtype=jnp.float32)  # [out, in]
        weights.append(jnp.transpose(w_pt))                           # [in, out]
        biases.append(jnp.zeros((dout,), dtype=jnp.float32))

    # NOTE: on v6e/v7x pass compute_dtype=jnp.bfloat16 for MXU peak rate at
    # production widths (512); default f32 keeps this small-shape check exact.
    out = mapping_network_pallas(x, weights, biases, tile_b=512,
                                 compute_dtype=jnp.float32)
    out = jax.block_until_ready(out)

    ref = mapping_network_ref(x, weights, biases, z_dim, w_dim)
    assert out.shape == (B, w_dim)
    assert jnp.allclose(out, ref, atol=1e-4, rtol=1e-4), "mismatch vs reference"

    print("KERNEL_OK")
</pallas_src>

<mosaic_0001>
module attributes {stable_mosaic.version = 11 : i64} {
  func.func @_mapping_kernel(%arg0: i32, %arg1: memref<8x32xf32, #tpu.memory_space<vmem>>, %arg2: memref<32x32xf32, #tpu.memory_space<vmem>>, %arg3: memref<7x32x32xf32, #tpu.memory_space<vmem>>, %arg4: memref<8x32xf32, #tpu.memory_space<vmem>>, %arg5: memref<8x32xf32, #tpu.memory_space<vmem>>) attributes {dimension_semantics = [#tpu.dimension_semantics<parallel>], iteration_bounds = array<i64: 1>, scalar_prefetch = 0 : i64, scratch_operands = 0 : i64, tpu.core_type = #tpu.core_type<tc>, window_params = [{transform_indices = @transform_0, window_bounds = array<i64: 8, 32>}, {pipeline_mode = #tpu.pipeline_mode<synchronous>, transform_indices = @transform_1, window_bounds = array<i64: 32, 32>}, {pipeline_mode = #tpu.pipeline_mode<synchronous>, transform_indices = @transform_2, window_bounds = array<i64: 7, 32, 32>}, {pipeline_mode = #tpu.pipeline_mode<synchronous>, transform_indices = @transform_3, window_bounds = array<i64: 8, 32>}, {transform_indices = @transform_4, window_bounds = array<i64: 8, 32>}]} {
    %c0 = arith.constant 0 : index
    %c0_0 = arith.constant 0 : index
    %0 = vector.load %arg1[%c0, %c0_0] : memref<8x32xf32, #tpu.memory_space<vmem>>, vector<8x32xf32>
    %1 = arith.mulf %0, %0 : vector<8x32xf32>
    %cst = arith.constant dense<0.000000e+00> : vector<8xf32>
    %2 = vector.multi_reduction <add>, %1, %cst [1] : vector<8x32xf32> to vector<8xf32>
    %3 = vector.shape_cast %2 : vector<8xf32> to vector<8x1xf32>
    %cst_1 = arith.constant 3.200000e+01 : f32
    %4 = vector.broadcast %cst_1 : f32 to vector<8x1xf32>
    %5 = arith.divf %3, %4 : vector<8x1xf32>
    %cst_2 = arith.constant 9.99999993E-9 : f32
    %6 = vector.broadcast %cst_2 : f32 to vector<8x1xf32>
    %7 = arith.addf %5, %6 : vector<8x1xf32>
    %8 = math.rsqrt %7 : vector<8x1xf32>
    %9 = vector.broadcast %8 : vector<8x1xf32> to vector<8x32xf32>
    %10 = arith.mulf %0, %9 : vector<8x32xf32>
    %c0_3 = arith.constant 0 : index
    %c0_4 = arith.constant 0 : index
    %11 = vector.load %arg2[%c0_3, %c0_4] : memref<32x32xf32, #tpu.memory_space<vmem>>, vector<32x32xf32>
    %c0_5 = arith.constant 0 : index
    %c0_6 = arith.constant 0 : index
    %12 = vector.load %arg4[%c0_5, %c0_6] : memref<8x32xf32, #tpu.memory_space<vmem>>, vector<1x32xf32>
    %cst_7 = arith.constant dense<0.000000e+00> : vector<8x32xf32>
    %13 = tpu.matmul %10, %11, %cst_7 {dimension_numbers = #tpu.dot_dimension_numbers<[1], [0], [0], [1], [0, 0, 1, 1], [], []>} : vector<8x32xf32>, vector<32x32xf32>, vector<8x32xf32> -> vector<8x32xf32>
    %14 = vector.broadcast %12 : vector<1x32xf32> to vector<8x32xf32>
    %15 = arith.addf %13, %14 : vector<8x32xf32>
    %cst_8 = arith.constant 0.000000e+00 : f32
    %16 = vector.broadcast %cst_8 : f32 to vector<8x32xf32>
    %17 = arith.maximumf %15, %16 : vector<8x32xf32>
    %c0_9 = arith.constant 0 : index
    %c0_10 = arith.constant 0 : index
    %c0_11 = arith.constant 0 : index
    %18 = vector.load %arg3[%c0_9, %c0_10, %c0_11] : memref<7x32x32xf32, #tpu.memory_space<vmem>>, vector<1x32x32xf32>
    %19 = vector.shape_cast %18 : vector<1x32x32xf32> to vector<32x32xf32>
    %c1 = arith.constant 1 : index
    %c0_12 = arith.constant 0 : index
    %20 = vector.load %arg4[%c1, %c0_12] : memref<8x32xf32, #tpu.memory_space<vmem>>, vector<1x32xf32>
    %cst_13 = arith.constant dense<0.000000e+00> : vector<8x32xf32>
    %21 = tpu.matmul %17, %19, %cst_13 {dimension_numbers = #tpu.dot_dimension_numbers<[1], [0], [0], [1], [0, 0, 1, 1], [], []>} : vector<8x32xf32>, vector<32x32xf32>, vector<8x32xf32> -> vector<8x32xf32>
    %22 = vector.broadcast %20 : vector<1x32xf32> to vector<8x32xf32>
    %23 = arith.addf %21, %22 : vector<8x32xf32>
    %cst_14 = arith.constant 0.000000e+00 : f32
    %24 = vector.broadcast %cst_14 : f32 to vector<8x32xf32>
    %25 = arith.maximumf %23, %24 : vector<8x32xf32>
    %c1_15 = arith.constant 1 : index
    %c0_16 = arith.constant 0 : index
    %c0_17 = arith.constant 0 : index
    %26 = vector.load %arg3[%c1_15, %c0_16, %c0_17] : memref<7x32x32xf32, #tpu.memory_space<vmem>>, vector<1x32x32xf32>
    %27 = vector.shape_cast %26 : vector<1x32x32xf32> to vector<32x32xf32>
    %c2 = arith.constant 2 : index
    %c0_18 = arith.constant 0 : index
    %28 = vector.load %arg4[%c2, %c0_18] : memref<8x32xf32, #tpu.memory_space<vmem>>, vector<1x32xf32>
    %cst_19 = arith.constant dense<0.000000e+00> : vector<8x32xf32>
    %29 = tpu.matmul %25, %27, %cst_19 {dimension_numbers = #tpu.dot_dimension_numbers<[1], [0], [0], [1], [0, 0, 1, 1], [], []>} : vector<8x32xf32>, vector<32x32xf32>, vector<8x32xf32> -> vector<8x32xf32>
    %30 = vector.broadcast %28 : vector<1x32xf32> to vector<8x32xf32>
    %31 = arith.addf %29, %30 : vector<8x32xf32>
    %cst_20 = arith.constant 0.000000e+00 : f32
    %32 = vector.broadcast %cst_20 : f32 to vector<8x32xf32>
    %33 = arith.maximumf %31, %32 : vector<8x32xf32>
    %c2_21 = arith.constant 2 : index
    %c0_22 = arith.constant 0 : index
    %c0_23 = arith.constant 0 : index
    %34 = vector.load %arg3[%c2_21, %c0_22, %c0_23] : memref<7x32x32xf32, #tpu.memory_space<vmem>>, vector<1x32x32xf32>
    %35 = vector.shape_cast %34 : vector<1x32x32xf32> to vector<32x32xf32>
    %c3 = arith.constant 3 : index
    %c0_24 = arith.constant 0 : index
    %36 = vector.load %arg4[%c3, %c0_24] : memref<8x32xf32, #tpu.memory_space<vmem>>, vector<1x32xf32>
    %cst_25 = arith.constant dense<0.000000e+00> : vector<8x32xf32>
    %37 = tpu.matmul %33, %35, %cst_25 {dimension_numbers = #tpu.dot_dimension_numbers<[1], [0], [0], [1], [0, 0, 1, 1], [], []>} : vector<8x32xf32>, vector<32x32xf32>, vector<8x32xf32> -> vector<8x32xf32>
    %38 = vector.broadcast %36 : vector<1x32xf32> to vector<8x32xf32>
    %39 = arith.addf %37, %38 : vector<8x32xf32>
    %cst_26 = arith.constant 0.000000e+00 : f32
    %40 = vector.broadcast %cst_26 : f32 to vector<8x32xf32>
    %41 = arith.maximumf %39, %40 : vector<8x32xf32>
    %c3_27 = arith.constant 3 : index
    %c0_28 = arith.constant 0 : index
    %c0_29 = arith.constant 0 : index
    %42 = vector.load %arg3[%c3_27, %c0_28, %c0_29] : memref<7x32x32xf32, #tpu.memory_space<vmem>>, vector<1x32x32xf32>
    %43 = vector.shape_cast %42 : vector<1x32x32xf32> to vector<32x32xf32>
    %c4 = arith.constant 4 : index
    %c0_30 = arith.constant 0 : index
    %44 = vector.load %arg4[%c4, %c0_30] : memref<8x32xf32, #tpu.memory_space<vmem>>, vector<1x32xf32>
    %cst_31 = arith.constant dense<0.000000e+00> : vector<8x32xf32>
    %45 = tpu.matmul %41, %43, %cst_31 {dimension_numbers = #tpu.dot_dimension_numbers<[1], [0], [0], [1], [0, 0, 1, 1], [], []>} : vector<8x32xf32>, vector<32x32xf32>, vector<8x32xf32> -> vector<8x32xf32>
    %46 = vector.broadcast %44 : vector<1x32xf32> to vector<8x32xf32>
    %47 = arith.addf %45, %46 : vector<8x32xf32>
    %cst_32 = arith.constant 0.000000e+00 : f32
    %48 = vector.broadcast %cst_32 : f32 to vector<8x32xf32>
    %49 = arith.maximumf %47, %48 : vector<8x32xf32>
    %c4_33 = arith.constant 4 : index
    %c0_34 = arith.constant 0 : index
    %c0_35 = arith.constant 0 : index
    %50 = vector.load %arg3[%c4_33, %c0_34, %c0_35] : memref<7x32x32xf32, #tpu.memory_space<vmem>>, vector<1x32x32xf32>
    %51 = vector.shape_cast %50 : vector<1x32x32xf32> to vector<32x32xf32>
    %c5 = arith.constant 5 : index
    %c0_36 = arith.constant 0 : index
    %52 = vector.load %arg4[%c5, %c0_36] : memref<8x32xf32, #tpu.memory_space<vmem>>, vector<1x32xf32>
    %cst_37 = arith.constant dense<0.000000e+00> : vector<8x32xf32>
    %53 = tpu.matmul %49, %51, %cst_37 {dimension_numbers = #tpu.dot_dimension_numbers<[1], [0], [0], [1], [0, 0, 1, 1], [], []>} : vector<8x32xf32>, vector<32x32xf32>, vector<8x32xf32> -> vector<8x32xf32>
    %54 = vector.broadcast %52 : vector<1x32xf32> to vector<8x32xf32>
    %55 = arith.addf %53, %54 : vector<8x32xf32>
    %cst_38 = arith.constant 0.000000e+00 : f32
    %56 = vector.broadcast %cst_38 : f32 to vector<8x32xf32>
    %57 = arith.maximumf %55, %56 : vector<8x32xf32>
    %c5_39 = arith.constant 5 : index
    %c0_40 = arith.constant 0 : index
    %c0_41 = arith.constant 0 : index
    %58 = vector.load %arg3[%c5_39, %c0_40, %c0_41] : memref<7x32x32xf32, #tpu.memory_space<vmem>>, vector<1x32x32xf32>
    %59 = vector.shape_cast %58 : vector<1x32x32xf32> to vector<32x32xf32>
    %c6 = arith.constant 6 : index
    %c0_42 = arith.constant 0 : index
    %60 = vector.load %arg4[%c6, %c0_42] : memref<8x32xf32, #tpu.memory_space<vmem>>, vector<1x32xf32>
    %cst_43 = arith.constant dense<0.000000e+00> : vector<8x32xf32>
    %61 = tpu.matmul %57, %59, %cst_43 {dimension_numbers = #tpu.dot_dimension_numbers<[1], [0], [0], [1], [0, 0, 1, 1], [], []>} : vector<8x32xf32>, vector<32x32xf32>, vector<8x32xf32> -> vector<8x32xf32>
    %62 = vector.broadcast %60 : vector<1x32xf32> to vector<8x32xf32>
    %63 = arith.addf %61, %62 : vector<8x32xf32>
    %cst_44 = arith.constant 0.000000e+00 : f32
    %64 = vector.broadcast %cst_44 : f32 to vector<8x32xf32>
    %65 = arith.maximumf %63, %64 : vector<8x32xf32>
    %c6_45 = arith.constant 6 : index
    %c0_46 = arith.constant 0 : index
    %c0_47 = arith.constant 0 : index
    %66 = vector.load %arg3[%c6_45, %c0_46, %c0_47] : memref<7x32x32xf32, #tpu.memory_space<vmem>>, vector<1x32x32xf32>
    %67 = vector.shape_cast %66 : vector<1x32x32xf32> to vector<32x32xf32>
    %c7 = arith.constant 7 : index
    %c0_48 = arith.constant 0 : index
    %68 = vector.load %arg4[%c7, %c0_48] : memref<8x32xf32, #tpu.memory_space<vmem>>, vector<1x32xf32>
    %cst_49 = arith.constant dense<0.000000e+00> : vector<8x32xf32>
    %69 = tpu.matmul %65, %67, %cst_49 {dimension_numbers = #tpu.dot_dimension_numbers<[1], [0], [0], [1], [0, 0, 1, 1], [], []>} : vector<8x32xf32>, vector<32x32xf32>, vector<8x32xf32> -> vector<8x32xf32>
    %70 = vector.broadcast %68 : vector<1x32xf32> to vector<8x32xf32>
    %71 = arith.addf %69, %70 : vector<8x32xf32>
    %c0_50 = arith.constant 0 : index
    %c0_51 = arith.constant 0 : index
    %72 = vector.load %arg5[%c0_50, %c0_51] : memref<8x32xf32, #tpu.memory_space<vmem>>, vector<8x32xf32>
    tpu.vector_store %arg5[%c0_50, %c0_51], %71 {strides = array<i32>} : memref<8x32xf32, #tpu.memory_space<vmem>>, vector<8x32xf32>,
    return
  }
  func.func @transform_0(%arg0: i32) -> (i32, i32) {
    %c0_i32 = arith.constant 0 : i32
    %c0_i32_0 = arith.constant 0 : i32
    return %arg0, %c0_i32 : i32, i32
  }
  func.func @transform_1(%arg0: i32) -> (i32, i32) {
    %c0_i32 = arith.constant 0 : i32
    %c0_i32_0 = arith.constant 0 : i32
    %c0_i32_1 = arith.constant 0 : i32
    return %c0_i32, %c0_i32_0 : i32, i32
  }
  func.func @transform_2(%arg0: i32) -> (i32, i32, i32) {
    %c0_i32 = arith.constant 0 : i32
    %c0_i32_0 = arith.constant 0 : i32
    %c0_i32_1 = arith.constant 0 : i32
    %c0_i32_2 = arith.constant 0 : i32
    return %c0_i32, %c0_i32_0, %c0_i32_1 : i32, i32, i32
  }
  func.func @transform_3(%arg0: i32) -> (i32, i32) {
    %c0_i32 = arith.constant 0 : i32
    %c0_i32_0 = arith.constant 0 : i32
    %c0_i32_1 = arith.constant 0 : i32
    return %c0_i32, %c0_i32_0 : i32, i32
  }
  func.func @transform_4(%arg0: i32) -> (i32, i32) {
    %c0_i32 = arith.constant 0 : i32
    %c0_i32_0 = arith.constant 0 : i32
    return %arg0, %c0_i32 : i32, i32
  }
}

</mosaic_0001>

<llo_original>
// kernel: tpu_custom_call.1
$region0: #{tpu_custom_call.1}
  #allocation0 [shape = 'u32[]', space=smem, size = 0x4, offset = 0x4, fixed_abs, tag = 'smem constant byte address 0x4 - core index']
  #allocation1 [shape = 'u32[144,128]{1,0:T(1,128)}', space=vmem, size = 0x12000, scoped, tag = 'internal scratch']
  %s0 = inlined_call_operand.hbm [shape: f32[8,32], index: 0, kind: input, shape index: {}]
  %s1 = inlined_call_operand.hbm [shape: f32[32,32], index: 1, kind: input, shape index: {}]
  %s2 = inlined_call_operand.hbm [shape: f32[7,32,32], index: 2, kind: input, shape index: {}]
  %s3 = inlined_call_operand.hbm [shape: f32[8,32], index: 3, kind: input, shape index: {}]
  %s4 = inlined_call_operand.hbm [shape: f32[8,32], index: 4, kind: output, shape index: {}]
  %s5 = sld [smem:[#allocation0]]
  $region42: #{tpu_custom_call.1} parent=0
    _
  %s7 = ssub.s32 1, %s5
  %s8 = scalar_select 0, %s7, %s5
  $region1: #{tpu_custom_call.1} parent=0
    #allocation2 [shape = 'u8[4096]{0}', space=vmem, size = 0x1000, scoped, tag = 'input window, operand 0, single buffered']
    #allocation3 [shape = 's32[1]{0}', space=sflag, size = 0x4, scoped, tag = 'scoped memory for tpu_custom_call.1']
    #allocation4 [shape = 's32[1]{0}', space=sflag, size = 0x4, scoped, tag = 'scoped memory for tpu_custom_call.1']
    #allocation5 [shape = 'u8[16384]{0}', space=vmem, size = 0x4000, scoped, tag = 'input window, operand 1, single buffered']
    #allocation6 [shape = 's32[1]{0}', space=sflag, size = 0x4, scoped, tag = 'scoped memory for tpu_custom_call.1']
    #allocation7 [shape = 'u8[114688]{0}', space=vmem, size = 0x1c000, scoped, tag = 'input window, operand 2, single buffered']
    #allocation8 [shape = 'u8[4096]{0}', space=vmem, size = 0x1000, scoped, tag = 'input window, operand 3, single buffered']
    #allocation9 [shape = 's32[1]{0}', space=sflag, size = 0x4, scoped, tag = 'scoped memory for tpu_custom_call.1']
    #allocation10 [shape = 'u8[4096]{0}', space=vmem, size = 0x1000, scoped, tag = 'output window, operand 0, single buffered']
    %9 = vsyncpa [#allocation3], 0
    %10 = vsyncpa [#allocation6], 0
    %11 = vsyncpa [#allocation9], 0
    %12 = vsyncpa [#allocation4], 0
    // Predicated region
    $region2: #{tpu_custom_call.1} parent=1 // pred_check
      _
    $region3: #{tpu_custom_call.1} parent=1 // pred_check_branch
      %14 = sbr.rel (0) target = $region5
    $region4: #{tpu_custom_call.1} parent=1 // pred_region
      %s16 = ssub.s32 128, 128
      %17 = vsyncadd [#allocation3], %s16
      %s19 = sshll.u32 [#allocation2], 4
      %s20 = int_to_ptr.vmem [resolvable:$true] %s19
      %22 = dma.hbm_to_vmem [thread:$0]  %s0, 128, %s20, [#allocation3]
    $region5: #{tpu_custom_call.1} parent=1 // pred_fallthru
      _
    // Predicated region
    $region6: #{tpu_custom_call.1} parent=1 // pred_check
      _
    $region7: #{tpu_custom_call.1} parent=1 // pred_check_branch
      %24 = sbr.rel (0) target = $region9
    $region8: #{tpu_custom_call.1} parent=1 // pred_region
      %s26 = ssub.s32 512, 512
      %27 = vsyncadd [#allocation6], %s26
      %s28 = sshll.u32 [#allocation5], 4
      %s29 = int_to_ptr.vmem [resolvable:$true] %s28
      %34 = dma.hbm_to_vmem [thread:$0]  %s1, 512, %s29, [#allocation6], 128, 128, 8
    $region9: #{tpu_custom_call.1} parent=1 // pred_fallthru
      _
    // Predicated region
    $region10: #{tpu_custom_call.1} parent=1 // pred_check
      _
    $region11: #{tpu_custom_call.1} parent=1 // pred_check_branch
      %36 = sbr.rel (0) target = $region13
    $region12: #{tpu_custom_call.1} parent=1 // pred_region
      %s38 = ssub.s32 3584, 3584
      %39 = vsyncadd [#allocation6], %s38
      %s40 = sshll.u32 [#allocation7], 4
      %s41 = int_to_ptr.vmem [resolvable:$true] %s40
      %46 = dma.hbm_to_vmem [thread:$0]  %s2, 3584, %s41, [#allocation6], 128, 128, 8
    $region13: #{tpu_custom_call.1} parent=1 // pred_fallthru
      _
    // Predicated region
    $region14: #{tpu_custom_call.1} parent=1 // pred_check
      _
    $region15: #{tpu_custom_call.1} parent=1 // pred_check_branch
      %48 = sbr.rel (0) target = $region17
    $region16: #{tpu_custom_call.1} parent=1 // pred_region
      %s50 = ssub.s32 128, 128
      %51 = vsyncadd [#allocation9], %s50
      %s53 = sshll.u32 [#allocation8], 4
      %s54 = int_to_ptr.vmem [resolvable:$true] %s53
      %56 = dma.hbm_to_vmem [thread:$0]  %s3, 128, %s54, [#allocation9]
    $region17: #{tpu_custom_call.1} parent=1 // pred_fallthru
      _
    // Predicated region
    $region18: #{tpu_custom_call.1} parent=1 // pred_check
      _
    $region19: #{tpu_custom_call.1} parent=1 // pred_check_branch
      %58 = sbr.rel (0) target = $region21
    $region20: #{tpu_custom_call.1} parent=1 // pred_region
      %59 = dma.done [#allocation3], 128
    $region21: #{tpu_custom_call.1} parent=1 // pred_fallthru
      _
    // Predicated region
    $region22: #{tpu_custom_call.1} parent=1 // pred_check
      _
    $region23: #{tpu_custom_call.1} parent=1 // pred_check_branch
      %61 = sbr.rel (0) target = $region25
    $region24: #{tpu_custom_call.1} parent=1 // pred_region
      %62 = dma.done [#allocation6], 512
    $region25: #{tpu_custom_call.1} parent=1 // pred_fallthru
      _
    // Predicated region
    $region26: #{tpu_custom_call.1} parent=1 // pred_check
      _
    $region27: #{tpu_custom_call.1} parent=1 // pred_check_branch
      %64 = sbr.rel (0) target = $region29
    $region28: #{tpu_custom_call.1} parent=1 // pred_region
      %65 = dma.done [#allocation6], 3584
    $region29: #{tpu_custom_call.1} parent=1 // pred_fallthru
      _
    // Predicated region
    $region30: #{tpu_custom_call.1} parent=1 // pred_check
      _
    $region31: #{tpu_custom_call.1} parent=1 // pred_check_branch
      %67 = sbr.rel (0) target = $region33
    $region32: #{tpu_custom_call.1} parent=1 // pred_region
      %68 = dma.done [#allocation9], 128
    $region33: #{tpu_custom_call.1} parent=1 // pred_fallthru
      _
    %v69 = vld [vmem:[#allocation2] sm:$0xff]
    %v70 = vmul.f32 %v69, %v69
    %vm71 = vcmask 261120
    %v72 = vsel %vm71, %v70, 0.0
    %73 = vadd.xlane.f32.xlu0 %v72
    %v74 = vpop.xlane.xlu0 %73
    %v75 = vrcp.pop 32.0
    %v76 = vmul.f32 %v74, %v75
    %v77 = vadd.f32 %v76, 1e-08
    %v78 = vrsqrt.pop %v77
    %v79 = vmul.f32 %v69, %v78
    %v80 = vld [vmem:[#allocation5] sm:$0xff]
    %v81 = vld [vmem:[#allocation5 + $0x8] sm:$0xff]
    %v82 = vld [vmem:[#allocation5 + $0x10] sm:$0xff]
    %v83 = vld [vmem:[#allocation5 + $0x18] sm:$0xff]
    %v84 = vld [vmem:[#allocation8] sm:$0x1]
    %v85 = vlaneseq
    %v86 = vshrl.u32 %v85, 7
    %v87 = vsub.s32 0, %v86
    %v88 = vrot.slane %v84, %v87
    %v90 = vsel %vm71, %v79, 0
    %92 = vmatprep.subr.mxu0 0.0
    %93 = vmatpush1.msra.mxu0 %v80
    %94 = vmatprep.subr.mxu0 0.0
    %95 = vmatpush1.msra.mxu0 %v81
    %96 = vmatprep.subr.mxu0 0.0
    %97 = vmatpush1.msra.mxu0 %v82
    %98 = vmatprep.subr.mxu0 0.0
    %99 = vmatpush1.msra.mxu0 %v83
    %100 = vmatprep.subr.mxu0 0.0
    %101 = vmatpush1.msra.mxu0 0.0
    %102 = vmatprep.subr.mxu0 0.0
    %103 = vmatpush1.msra.mxu0 0.0
    %104 = vmatprep.subr.mxu0 0.0
    %105 = vmatpush1.msra.mxu0 0.0
    %106 = vmatprep.subr.mxu0 0.0
    %107 = vmatpush1.msra.mxu0 0.0
    %108 = vmatprep.subr.mxu0 0.0
    %109 = vmatpush1.msra.mxu0 0.0
    %110 = vmatprep.subr.mxu0 0.0
    %111 = vmatpush1.msra.mxu0 0.0
    %112 = vmatprep.subr.mxu0 0.0
    %113 = vmatpush1.msra.mxu0 0.0
    %114 = vmatprep.subr.mxu0 0.0
    %115 = vmatpush1.msra.mxu0 0.0
    %116 = vmatprep.subr.mxu0 0.0
    %117 = vmatpush1.msra.mxu0 0.0
    %118 = vmatprep.subr.mxu0 0.0
    %119 = vmatpush1.msra.mxu0 0.0
    %120 = vmatprep.subr.mxu0 0.0
    %121 = vmatpush1.msra.mxu0 0.0
    %122 = vmatprep.subr.mxu0 0.0
    %123 = vmatpush1.msra.mxu0 0.0
    %124 = vmatprep.subr.mxu0 0.0
    %125 = vmatpush1.msra.mxu0 0.0
    %126 = vmatprep.subr.mxu0 0.0
    %127 = vmatpush1.msra.mxu0 0.0
    %128 = vmatprep.subr.mxu0 0.0
    %129 = vmatpush1.msra.mxu0 0.0
    %130 = vmatprep.subr.mxu0 0.0
    %131 = vmatpush1.msra.mxu0 0.0
    %132 = vmatprep.subr.mxu0 0.0
    %133 = vmatpush1.msra.mxu0 0.0
    %134 = vmatprep.subr.mxu0 0.0
    %135 = vmatpush1.msra.mxu0 0.0
    %136 = vmatprep.subr.mxu0 0.0
    %137 = vmatpush1.msra.mxu0 0.0
    %138 = vmatprep.subr.mxu0 0.0
    %139 = vmatpush1.msra.mxu0 0.0
    %140 = vmatprep.subr.mxu0 0.0
    %141 = vmatpush1.msra.mxu0 0.0
    %142 = vmatprep.subr.mxu0 0.0
    %143 = vmatpush1.msra.mxu0 0.0
    %144 = vmatprep.subr.mxu0 0.0
    %145 = vmatpush1.msra.mxu0 0.0
    %146 = vmatprep.subr.mxu0 0.0
    %147 = vmatpush1.msra.mxu0 0.0
    %148 = vmatprep.subr.mxu0 0.0
    %149 = vmatpush1.msra.mxu0 0.0
    %150 = vmatprep.subr.mxu0 0.0
    %151 = vmatpush1.msra.mxu0 0.0
    %152 = vmatprep.subr.mxu0 0.0
    %153 = vmatpush1.msra.mxu0 0.0
    %154 = vmatprep.subr.mxu0 0.0
    %155 = vmatpush1.msra.mxu0 0.0
    %156 = vmatprep.mubr.f32.mxu0 0.0
    %157 = vmatmul.mubr.f32.gmra.mrb[0].mxu0 %v90
    %v158 = vpop.f32.mrb[0].mxu0
    %v159 = vadd.f32 %v88, %v158
    %v160 = vpop.f32.mrb[0].mxu0
    %161 = vdwg.mxu0
    %v162 = vmax.f32 %v159, 0.0
    %v163 = vld [vmem:[#allocation7] sm:$0xff]
    %v164 = vld [vmem:[#allocation7 + $0x8] sm:$0xff]
    %v165 = vld [vmem:[#allocation7 + $0x10] sm:$0xff]
    %v166 = vld [vmem:[#allocation7 + $0x18] sm:$0xff]
    %v167 = vld [vmem:[#allocation8 + $0x1] sm:$0x1]
    %v168 = vlaneseq
    %v169 = vshrl.u32 %v168, 7
    %v170 = vsub.s32 0, %v169
    %v171 = vrot.slane %v167, %v170
    %v173 = vsel %vm71, %v162, 0
    %175 = vmatprep.subr.mxu0 0.0
    %176 = vmatpush1.msra.mxu0 %v163
    %177 = vmatprep.subr.mxu0 0.0
    %178 = vmatpush1.msra.mxu0 %v164
    %179 = vmatprep.subr.mxu0 0.0
    %180 = vmatpush1.msra.mxu0 %v165
    %181 = vmatprep.subr.mxu0 0.0
    %182 = vmatpush1.msra.mxu0 %v166
    %183 = vmatprep.subr.mxu0 0.0
    %184 = vmatpush1.msra.mxu0 0.0
    %185 = vmatprep.subr.mxu0 0.0
    %186 = vmatpush1.msra.mxu0 0.0
    %187 = vmatprep.subr.mxu0 0.0
    %188 = vmatpush1.msra.mxu0 0.0
    %189 = vmatprep.subr.mxu0 0.0
    %190 = vmatpush1.msra.mxu0 0.0
    %191 = vmatprep.subr.mxu0 0.0
    %192 = vmatpush1.msra.mxu0 0.0
    %193 = vmatprep.subr.mxu0 0.0
    %194 = vmatpush1.msra.mxu0 0.0
    %195 = vmatprep.subr.mxu0 0.0
    %196 = vmatpush1.msra.mxu0 0.0
    %197 = vmatprep.subr.mxu0 0.0
    %198 = vmatpush1.msra.mxu0 0.0
    %199 = vmatprep.subr.mxu0 0.0
    %200 = vmatpush1.msra.mxu0 0.0
    %201 = vmatprep.subr.mxu0 0.0
    %202 = vmatpush1.msra.mxu0 0.0
    %203 = vmatprep.subr.mxu0 0.0
    %204 = vmatpush1.msra.mxu0 0.0
    %205 = vmatprep.subr.mxu0 0.0
    %206 = vmatpush1.msra.mxu0 0.0
    %207 = vmatprep.subr.mxu0 0.0
    %208 = vmatpush1.msra.mxu0 0.0
    %209 = vmatprep.subr.mxu0 0.0
    %210 = vmatpush1.msra.mxu0 0.0
    %211 = vmatprep.subr.mxu0 0.0
    %212 = vmatpush1.msra.mxu0 0.0
    %213 = vmatprep.subr.mxu0 0.0
    %214 = vmatpush1.msra.mxu0 0.0
    %215 = vmatprep.subr.mxu0 0.0
    %216 = vmatpush1.msra.mxu0 0.0
    %217 = vmatprep.subr.mxu0 0.0
    %218 = vmatpush1.msra.mxu0 0.0
    %219 = vmatprep.subr.mxu0 0.0
    %220 = vmatpush1.msra.mxu0 0.0
    %221 = vmatprep.subr.mxu0 0.0
    %222 = vmatpush1.msra.mxu0 0.0
    %223 = vmatprep.subr.mxu0 0.0
    %224 = vmatpush1.msra.mxu0 0.0
    %225 = vmatprep.subr.mxu0 0.0
    %226 = vmatpush1.msra.mxu0 0.0
    %227 = vmatprep.subr.mxu0 0.0
    %228 = vmatpush1.msra.mxu0 0.0
    %229 = vmatprep.subr.mxu0 0.0
    %230 = vmatpush1.msra.mxu0 0.0
    %231 = vmatprep.subr.mxu0 0.0
    %232 = vmatpush1.msra.mxu0 0.0
    %233 = vmatprep.subr.mxu0 0.0
    %234 = vmatpush1.msra.mxu0 0.0
    %235 = vmatprep.subr.mxu0 0.0
    %236 = vmatpush1.msra.mxu0 0.0
    %237 = vmatprep.subr.mxu0 0.0
    %238 = vmatpush1.msra.mxu0 0.0
    %239 = vmatprep.mubr.f32.mxu0 0.0
    %240 = vmatmul.mubr.f32.gmra.mrb[0].mxu0 %v173
    %v241 = vpop.f32.mrb[0].mxu0
    %v242 = vadd.f32 %v171, %v241
    %v243 = vpop.f32.mrb[0].mxu0
    %244 = vdwg.mxu0
    %v245 = vmax.f32 %v242, 0.0
    %s246 = scalar_lea.vmem [#allocation7], 32
    %v247 = vld [vmem:[%s246] sm:$0xff]
    %v248 = vld [vmem:[%s246 + $0x8] sm:$0xff]
    %v249 = vld [vmem:[%s246 + $0x10] sm:$0xff]
    %v250 = vld [vmem:[%s246 + $0x18] sm:$0xff]
    %v251 = vld [vmem:[#allocation8 + $0x2] sm:$0x1]
    %v252 = vlaneseq
    %v253 = vshrl.u32 %v252, 7
    %v254 = vsub.s32 0, %v253
    %v255 = vrot.slane %v251, %v254
    %v257 = vsel %vm71, %v245, 0
    %259 = vmatprep.subr.mxu0 0.0
    %260 = vmatpush1.msra.mxu0 %v247
    %261 = vmatprep.subr.mxu0 0.0
    %262 = vmatpush1.msra.mxu0 %v248
    %263 = vmatprep.subr.mxu0 0.0
    %264 = vmatpush1.msra.mxu0 %v249
    %265 = vmatprep.subr.mxu0 0.0
    %266 = vmatpush1.msra.mxu0 %v250
    %267 = vmatprep.subr.mxu0 0.0
    %268 = vmatpush1.msra.mxu0 0.0
    %269 = vmatprep.subr.mxu0 0.0
    %270 = vmatpush1.msra.mxu0 0.0
    %271 = vmatprep.subr.mxu0 0.0
    %272 = vmatpush1.msra.mxu0 0.0
    %273 = vmatprep.subr.mxu0 0.0
    %274 = vmatpush1.msra.mxu0 0.0
    %275 = vmatprep.subr.mxu0 0.0
    %276 = vmatpush1.msra.mxu0 0.0
    %277 = vmatprep.subr.mxu0 0.0
    %278 = vmatpush1.msra.mxu0 0.0
    %279 = vmatprep.subr.mxu0 0.0
    %280 = vmatpush1.msra.mxu0 0.0
    %281 = vmatprep.subr.mxu0 0.0
    %282 = vmatpush1.msra.mxu0 0.0
    %283 = vmatprep.subr.mxu0 0.0
    %284 = vmatpush1.msra.mxu0 0.0
    %285 = vmatprep.subr.mxu0 0.0
    %286 = vmatpush1.msra.mxu0 0.0
    %287 = vmatprep.subr.mxu0 0.0
    %288 = vmatpush1.msra.mxu0 0.0
    %289 = vmatprep.subr.mxu0 0.0
    %290 = vmatpush1.msra.mxu0 0.0
    %291 = vmatprep.subr.mxu0 0.0
    %292 = vmatpush1.msra.mxu0 0.0
    %293 = vmatprep.subr.mxu0 0.0
    %294 = vmatpush1.msra.mxu0 0.0
    %295 = vmatprep.subr.mxu0 0.0
    %296 = vmatpush1.msra.mxu0 0.0
    %297 = vmatprep.subr.mxu0 0.0
    %298 = vmatpush1.msra.mxu0 0.0
    %299 = vmatprep.subr.mxu0 0.0
    %300 = vmatpush1.msra.mxu0 0.0
    %301 = vmatprep.subr.mxu0 0.0
    %302 = vmatpush1.msra.mxu0 0.0
    %303 = vmatprep.subr.mxu0 0.0
    %304 = vmatpush1.msra.mxu0 0.0
    %305 = vmatprep.subr.mxu0 0.0
    %306 = vmatpush1.msra.mxu0 0.0
    %307 = vmatprep.subr.mxu0 0.0
    %308 = vmatpush1.msra.mxu0 0.0
    %309 = vmatprep.subr.mxu0 0.0
    %310 = vmatpush1.msra.mxu0 0.0
    %311 = vmatprep.subr.mxu0 0.0
    %312 = vmatpush1.msra.mxu0 0.0
    %313 = vmatprep.subr.mxu0 0.0
    %314 = vmatpush1.msra.mxu0 0.0
    %315 = vmatprep.subr.mxu0 0.0
    %316 = vmatpush1.msra.mxu0 0.0
    %317 = vmatprep.subr.mxu0 0.0
    %318 = vmatpush1.msra.mxu0 0.0
    %319 = vmatprep.subr.mxu0 0.0
    %320 = vmatpush1.msra.mxu0 0.0
    %321 = vmatprep.subr.mxu0 0.0
    %322 = vmatpush1.msra.mxu0 0.0
    %323 = vmatprep.mubr.f32.mxu0 0.0
    %324 = vmatmul.mubr.f32.gmra.mrb[0].mxu0 %v257
    %v325 = vpop.f32.mrb[0].mxu0
    %v326 = vadd.f32 %v255, %v325
    %v327 = vpop.f32.mrb[0].mxu0
    %328 = vdwg.mxu0
    %v329 = vmax.f32 %v326, 0.0
    %s330 = scalar_lea.vmem [#allocation7], 64
    %v331 = vld [vmem:[%s330] sm:$0xff]
    %v332 = vld [vmem:[%s330 + $0x8] sm:$0xff]
    %v333 = vld [vmem:[%s330 + $0x10] sm:$0xff]
    %v334 = vld [vmem:[%s330 + $0x18] sm:$0xff]
    %v335 = vld [vmem:[#allocation8 + $0x3] sm:$0x1]
    %v336 = vlaneseq
    %v337 = vshrl.u32 %v336, 7
    %v338 = vsub.s32 0, %v337
    %v339 = vrot.slane %v335, %v338
    %v341 = vsel %vm71, %v329, 0
    %343 = vmatprep.subr.mxu0 0.0
    %344 = vmatpush1.msra.mxu0 %v331
    %345 = vmatprep.subr.mxu0 0.0
    %346 = vmatpush1.msra.mxu0 %v332
    %347 = vmatprep.subr.mxu0 0.0
    %348 = vmatpush1.msra.mxu0 %v333
    %349 = vmatprep.subr.mxu0 0.0
    %350 = vmatpush1.msra.mxu0 %v334
    %351 = vmatprep.subr.mxu0 0.0
    %352 = vmatpush1.msra.mxu0 0.0
    %353 = vmatprep.subr.mxu0 0.0
    %354 = vmatpush1.msra.mxu0 0.0
    %355 = vmatprep.subr.mxu0 0.0
    %356 = vmatpush1.msra.mxu0 0.0
    %357 = vmatprep.subr.mxu0 0.0
    %358 = vmatpush1.msra.mxu0 0.0
    %359 = vmatprep.subr.mxu0 0.0
    %360 = vmatpush1.msra.mxu0 0.0
    %361 = vmatprep.subr.mxu0 0.0
    %362 = vmatpush1.msra.mxu0 0.0
    %363 = vmatprep.subr.mxu0 0.0
    %364 = vmatpush1.msra.mxu0 0.0
    %365 = vmatprep.subr.mxu0 0.0
    %366 = vmatpush1.msra.mxu0 0.0
    %367 = vmatprep.subr.mxu0 0.0
    %368 = vmatpush1.msra.mxu0 0.0
    %369 = vmatprep.subr.mxu0 0.0
    %370 = vmatpush1.msra.mxu0 0.0
    %371 = vmatprep.subr.mxu0 0.0
    %372 = vmatpush1.msra.mxu0 0.0
    %373 = vmatprep.subr.mxu0 0.0
    %374 = vmatpush1.msra.mxu0 0.0
    %375 = vmatprep.subr.mxu0 0.0
    %376 = vmatpush1.msra.mxu0 0.0
    %377 = vmatprep.subr.mxu0 0.0
    %378 = vmatpush1.msra.mxu0 0.0
    %379 = vmatprep.subr.mxu0 0.0
    %380 = vmatpush1.msra.mxu0 0.0
    %381 = vmatprep.subr.mxu0 0.0
    %382 = vmatpush1.msra.mxu0 0.0
    %383 = vmatprep.subr.mxu0 0.0
    %384 = vmatpush1.msra.mxu0 0.0
    %385 = vmatprep.subr.mxu0 0.0
    %386 = vmatpush1.msra.mxu0 0.0
    %387 = vmatprep.subr.mxu0 0.0
    %388 = vmatpush1.msra.mxu0 0.0
    %389 = vmatprep.subr.mxu0 0.0
    %390 = vmatpush1.msra.mxu0 0.0
    %391 = vmatprep.subr.mxu0 0.0
    %392 = vmatpush1.msra.mxu0 0.0
    %393 = vmatprep.subr.mxu0 0.0
    %394 = vmatpush1.msra.mxu0 0.0
    %395 = vmatprep.subr.mxu0 0.0
    %396 = vmatpush1.msra.mxu0 0.0
    %397 = vmatprep.subr.mxu0 0.0
    %398 = vmatpush1.msra.mxu0 0.0
    %399 = vmatprep.subr.mxu0 0.0
    %400 = vmatpush1.msra.mxu0 0.0
    %401 = vmatprep.subr.mxu0 0.0
    %402 = vmatpush1.msra.mxu0 0.0
    %403 = vmatprep.subr.mxu0 0.0
    %404 = vmatpush1.msra.mxu0 0.0
    %405 = vmatprep.subr.mxu0 0.0
    %406 = vmatpush1.msra.mxu0 0.0
    %407 = vmatprep.mubr.f32.mxu0 0.0
    %408 = vmatmul.mubr.f32.gmra.mrb[0].mxu0 %v341
    %v409 = vpop.f32.mrb[0].mxu0
    %v410 = vadd.f32 %v339, %v409
    %v411 = vpop.f32.mrb[0].mxu0
    %412 = vdwg.mxu0
    %v413 = vmax.f32 %v410, 0.0
    %s414 = scalar_lea.vmem [#allocation7], 96
    %v415 = vld [vmem:[%s414] sm:$0xff]
    %v416 = vld [vmem:[%s414 + $0x8] sm:$0xff]
    %v417 = vld [vmem:[%s414 + $0x10] sm:$0xff]
    %v418 = vld [vmem:[%s414 + $0x18] sm:$0xff]
    %v419 = vld [vmem:[#allocation8 + $0x4] sm:$0x1]
    %v420 = vlaneseq
    %v421 = vshrl.u32 %v420, 7
    %v422 = vsub.s32 0, %v421
    %v423 = vrot.slane %v419, %v422
    %v425 = vsel %vm71, %v413, 0
    %427 = vmatprep.subr.mxu0 0.0
    %428 = vmatpush1.msra.mxu0 %v415
    %429 = vmatprep.subr.mxu0 0.0
    %430 = vmatpush1.msra.mxu0 %v416
    %431 = vmatprep.subr.mxu0 0.0
    %432 = vmatpush1.msra.mxu0 %v417
    %433 = vmatprep.subr.mxu0 0.0
    %434 = vmatpush1.msra.mxu0 %v418
    %435 = vmatprep.subr.mxu0 0.0
    %436 = vmatpush1.msra.mxu0 0.0
    %437 = vmatprep.subr.mxu0 0.0
    %438 = vmatpush1.msra.mxu0 0.0
    %439 = vmatprep.subr.mxu0 0.0
    %440 = vmatpush1.msra.mxu0 0.0
    %441 = vmatprep.subr.mxu0 0.0
    %442 = vmatpush1.msra.mxu0 0.0
    %443 = vmatprep.subr.mxu0 0.0
    %444 = vmatpush1.msra.mxu0 0.0
    %445 = vmatprep.subr.mxu0 0.0
    %446 = vmatpush1.msra.mxu0 0.0
    %447 = vmatprep.subr.mxu0 0.0
    %448 = vmatpush1.msra.mxu0 0.0
    %449 = vmatprep.subr.mxu0 0.0
    %450 = vmatpush1.msra.mxu0 0.0
    %451 = vmatprep.subr.mxu0 0.0
    %452 = vmatpush1.msra.mxu0 0.0
    %453 = vmatprep.subr.mxu0 0.0
    %454 = vmatpush1.msra.mxu0 0.0
    %455 = vmatprep.subr.mxu0 0.0
    %456 = vmatpush1.msra.mxu0 0.0
    %457 = vmatprep.subr.mxu0 0.0
    %458 = vmatpush1.msra.mxu0 0.0
    %459 = vmatprep.subr.mxu0 0.0
    %460 = vmatpush1.msra.mxu0 0.0
    %461 = vmatprep.subr.mxu0 0.0
    %462 = vmatpush1.msra.mxu0 0.0
    %463 = vmatprep.subr.mxu0 0.0
    %464 = vmatpush1.msra.mxu0 0.0
    %465 = vmatprep.subr.mxu0 0.0
    %466 = vmatpush1.msra.mxu0 0.0
    %467 = vmatprep.subr.mxu0 0.0
    %468 = vmatpush1.msra.mxu0 0.0
    %469 = vmatprep.subr.mxu0 0.0
    %470 = vmatpush1.msra.mxu0 0.0
    %471 = vmatprep.subr.mxu0 0.0
    %472 = vmatpush1.msra.mxu0 0.0
    %473 = vmatprep.subr.mxu0 0.0
    %474 = vmatpush1.msra.mxu0 0.0
    %475 = vmatprep.subr.mxu0 0.0
    %476 = vmatpush1.msra.mxu0 0.0
    %477 = vmatprep.subr.mxu0 0.0
    %478 = vmatpush1.msra.mxu0 0.0
    %479 = vmatprep.subr.mxu0 0.0
    %480 = vmatpush1.msra.mxu0 0.0
    %481 = vmatprep.subr.mxu0 0.0
    %482 = vmatpush1.msra.mxu0 0.0
    %483 = vmatprep.subr.mxu0 0.0
    %484 = vmatpush1.msra.mxu0 0.0
    %485 = vmatprep.subr.mxu0 0.0
    %486 = vmatpush1.msra.mxu0 0.0
    %487 = vmatprep.subr.mxu0 0.0
    %488 = vmatpush1.msra.mxu0 0.0
    %489 = vmatprep.subr.mxu0 0.0
    %490 = vmatpush1.msra.mxu0 0.0
    %491 = vmatprep.mubr.f32.mxu0 0.0
    %492 = vmatmul.mubr.f32.gmra.mrb[0].mxu0 %v425
    %v493 = vpop.f32.mrb[0].mxu0
    %v494 = vadd.f32 %v423, %v493
    %v495 = vpop.f32.mrb[0].mxu0
    %496 = vdwg.mxu0
    %v497 = vmax.f32 %v494, 0.0
    %s498 = scalar_lea.vmem [#allocation7], 128
    %v499 = vld [vmem:[%s498] sm:$0xff]
    %v500 = vld [vmem:[%s498 + $0x8] sm:$0xff]
    %v501 = vld [vmem:[%s498 + $0x10] sm:$0xff]
    %v502 = vld [vmem:[%s498 + $0x18] sm:$0xff]
    %v503 = vld [vmem:[#allocation8 + $0x5] sm:$0x1]
    %v504 = vlaneseq
    %v505 = vshrl.u32 %v504, 7
    %v506 = vsub.s32 0, %v505
    %v507 = vrot.slane %v503, %v506
    %v509 = vsel %vm71, %v497, 0
    %511 = vmatprep.subr.mxu0 0.0
    %512 = vmatpush1.msra.mxu0 %v499
    %513 = vmatprep.subr.mxu0 0.0
    %514 = vmatpush1.msra.mxu0 %v500
    %515 = vmatprep.subr.mxu0 0.0
    %516 = vmatpush1.msra.mxu0 %v501
    %517 = vmatprep.subr.mxu0 0.0
    %518 = vmatpush1.msra.mxu0 %v502
    %519 = vmatprep.subr.mxu0 0.0
    %520 = vmatpush1.msra.mxu0 0.0
    %521 = vmatprep.subr.mxu0 0.0
    %522 = vmatpush1.msra.mxu0 0.0
    %523 = vmatprep.subr.mxu0 0.0
    %524 = vmatpush1.msra.mxu0 0.0
    %525 = vmatprep.subr.mxu0 0.0
    %526 = vmatpush1.msra.mxu0 0.0
    %527 = vmatprep.subr.mxu0 0.0
    %528 = vmatpush1.msra.mxu0 0.0
    %529 = vmatprep.subr.mxu0 0.0
    %530 = vmatpush1.msra.mxu0 0.0
    %531 = vmatprep.subr.mxu0 0.0
    %532 = vmatpush1.msra.mxu0 0.0
    %533 = vmatprep.subr.mxu0 0.0
    %534 = vmatpush1.msra.mxu0 0.0
    %535 = vmatprep.subr.mxu0 0.0
    %536 = vmatpush1.msra.mxu0 0.0
    %537 = vmatprep.subr.mxu0 0.0
    %538 = vmatpush1.msra.mxu0 0.0
    %539 = vmatprep.subr.mxu0 0.0
    %540 = vmatpush1.msra.mxu0 0.0
    %541 = vmatprep.subr.mxu0 0.0
    %542 = vmatpush1.msra.mxu0 0.0
    %543 = vmatprep.subr.mxu0 0.0
    %544 = vmatpush1.msra.mxu0 0.0
    %545 = vmatprep.subr.mxu0 0.0
    %546 = vmatpush1.msra.mxu0 0.0
    %547 = vmatprep.subr.mxu0 0.0
    %548 = vmatpush1.msra.mxu0 0.0
    %549 = vmatprep.subr.mxu0 0.0
    %550 = vmatpush1.msra.mxu0 0.0
    %551 = vmatprep.subr.mxu0 0.0
    %552 = vmatpush1.msra.mxu0 0.0
    %553 = vmatprep.subr.mxu0 0.0
    %554 = vmatpush1.msra.mxu0 0.0
    %555 = vmatprep.subr.mxu0 0.0
    %556 = vmatpush1.msra.mxu0 0.0
    %557 = vmatprep.subr.mxu0 0.0
    %558 = vmatpush1.msra.mxu0 0.0
    %559 = vmatprep.subr.mxu0 0.0
    %560 = vmatpush1.msra.mxu0 0.0
    %561 = vmatprep.subr.mxu0 0.0
    %562 = vmatpush1.msra.mxu0 0.0
    %563 = vmatprep.subr.mxu0 0.0
    %564 = vmatpush1.msra.mxu0 0.0
    %565 = vmatprep.subr.mxu0 0.0
    %566 = vmatpush1.msra.mxu0 0.0
    %567 = vmatprep.subr.mxu0 0.0
    %568 = vmatpush1.msra.mxu0 0.0
    %569 = vmatprep.subr.mxu0 0.0
    %570 = vmatpush1.msra.mxu0 0.0
    %571 = vmatprep.subr.mxu0 0.0
    %572 = vmatpush1.msra.mxu0 0.0
    %573 = vmatprep.subr.mxu0 0.0
    %574 = vmatpush1.msra.mxu0 0.0
    %575 = vmatprep.mubr.f32.mxu0 0.0
    %576 = vmatmul.mubr.f32.gmra.mrb[0].mxu0 %v509
    %v577 = vpop.f32.mrb[0].mxu0
    %v578 = vadd.f32 %v507, %v577
    %v579 = vpop.f32.mrb[0].mxu0
    %580 = vdwg.mxu0
    %v581 = vmax.f32 %v578, 0.0
    %s582 = scalar_lea.vmem [#allocation7], 160
    %v583 = vld [vmem:[%s582] sm:$0xff]
    %v584 = vld [vmem:[%s582 + $0x8] sm:$0xff]
    %v585 = vld [vmem:[%s582 + $0x10] sm:$0xff]
    %v586 = vld [vmem:[%s582 + $0x18] sm:$0xff]
    %v587 = vld [vmem:[#allocation8 + $0x6] sm:$0x1]
    %v588 = vlaneseq
    %v589 = vshrl.u32 %v588, 7
    %v590 = vsub.s32 0, %v589
    %v591 = vrot.slane %v587, %v590
    %v593 = vsel %vm71, %v581, 0
    %595 = vmatprep.subr.mxu0 0.0
    %596 = vmatpush1.msra.mxu0 %v583
    %597 = vmatprep.subr.mxu0 0.0
    %598 = vmatpush1.msra.mxu0 %v584
    %599 = vmatprep.subr.mxu0 0.0
    %600 = vmatpush1.msra.mxu0 %v585
    %601 = vmatprep.subr.mxu0 0.0
    %602 = vmatpush1.msra.mxu0 %v586
    %603 = vmatprep.subr.mxu0 0.0
    %604 = vmatpush1.msra.mxu0 0.0
    %605 = vmatprep.subr.mxu0 0.0
    %606 = vmatpush1.msra.mxu0 0.0
    %607 = vmatprep.subr.mxu0 0.0
    %608 = vmatpush1.msra.mxu0 0.0
    %609 = vmatprep.subr.mxu0 0.0
    %610 = vmatpush1.msra.mxu0 0.0
    %611 = vmatprep.subr.mxu0 0.0
    %612 = vmatpush1.msra.mxu0 0.0
    %613 = vmatprep.subr.mxu0 0.0
    %614 = vmatpush1.msra.mxu0 0.0
    %615 = vmatprep.subr.mxu0 0.0
    %616 = vmatpush1.msra.mxu0 0.0
    %617 = vmatprep.subr.mxu0 0.0
    %618 = vmatpush1.msra.mxu0 0.0
    %619 = vmatprep.subr.mxu0 0.0
    %620 = vmatpush1.msra.mxu0 0.0
    %621 = vmatprep.subr.mxu0 0.0
    %622 = vmatpush1.msra.mxu0 0.0
    %623 = vmatprep.subr.mxu0 0.0
    %624 = vmatpush1.msra.mxu0 0.0
    %625 = vmatprep.subr.mxu0 0.0
    %626 = vmatpush1.msra.mxu0 0.0
    %627 = vmatprep.subr.mxu0 0.0
    %628 = vmatpush1.msra.mxu0 0.0
    %629 = vmatprep.subr.mxu0 0.0
    %630 = vmatpush1.msra.mxu0 0.0
    %631 = vmatprep.subr.mxu0 0.0
    %632 = vmatpush1.msra.mxu0 0.0
    %633 = vmatprep.subr.mxu0 0.0
    %634 = vmatpush1.msra.mxu0 0.0
    %635 = vmatprep.subr.mxu0 0.0
    %636 = vmatpush1.msra.mxu0 0.0
    %637 = vmatprep.subr.mxu0 0.0
    %638 = vmatpush1.msra.mxu0 0.0
    %639 = vmatprep.subr.mxu0 0.0
    %640 = vmatpush1.msra.mxu0 0.0
    %641 = vmatprep.subr.mxu0 0.0
    %642 = vmatpush1.msra.mxu0 0.0
    %643 = vmatprep.subr.mxu0 0.0
    %644 = vmatpush1.msra.mxu0 0.0
    %645 = vmatprep.subr.mxu0 0.0
    %646 = vmatpush1.msra.mxu0 0.0
    %647 = vmatprep.subr.mxu0 0.0
    %648 = vmatpush1.msra.mxu0 0.0
    %649 = vmatprep.subr.mxu0 0.0
    %650 = vmatpush1.msra.mxu0 0.0
    %651 = vmatprep.subr.mxu0 0.0
    %652 = vmatpush1.msra.mxu0 0.0
    %653 = vmatprep.subr.mxu0 0.0
    %654 = vmatpush1.msra.mxu0 0.0
    %655 = vmatprep.subr.mxu0 0.0
    %656 = vmatpush1.msra.mxu0 0.0
    %657 = vmatprep.subr.mxu0 0.0
    %658 = vmatpush1.msra.mxu0 0.0
    %659 = vmatprep.mubr.f32.mxu0 0.0
    %660 = vmatmul.mubr.f32.gmra.mrb[0].mxu0 %v593
    %v661 = vpop.f32.mrb[0].mxu0
    %v662 = vadd.f32 %v591, %v661
    %v663 = vpop.f32.mrb[0].mxu0
    %664 = vdwg.mxu0
    %v665 = vmax.f32 %v662, 0.0
    %s666 = scalar_lea.vmem [#allocation7], 192
    %v667 = vld [vmem:[%s666] sm:$0xff]
    %v668 = vld [vmem:[%s666 + $0x8] sm:$0xff]
    %v669 = vld [vmem:[%s666 + $0x10] sm:$0xff]
    %v670 = vld [vmem:[%s666 + $0x18] sm:$0xff]
    %v671 = vld [vmem:[#allocation8 + $0x7] sm:$0x1]
    %v672 = vlaneseq
    %v673 = vshrl.u32 %v672, 7
    %v674 = vsub.s32 0, %v673
    %v675 = vrot.slane %v671, %v674
    %v677 = vsel %vm71, %v665, 0
    %679 = vmatprep.subr.mxu0 0.0
    %680 = vmatpush1.msra.mxu0 %v667
    %681 = vmatprep.subr.mxu0 0.0
    %682 = vmatpush1.msra.mxu0 %v668
    %683 = vmatprep.subr.mxu0 0.0
    %684 = vmatpush1.msra.mxu0 %v669
    %685 = vmatprep.subr.mxu0 0.0
    %686 = vmatpush1.msra.mxu0 %v670
    %687 = vmatprep.subr.mxu0 0.0
    %688 = vmatpush1.msra.mxu0 0.0
    %689 = vmatprep.subr.mxu0 0.0
    %690 = vmatpush1.msra.mxu0 0.0
    %691 = vmatprep.subr.mxu0 0.0
    %692 = vmatpush1.msra.mxu0 0.0
    %693 = vmatprep.subr.mxu0 0.0
    %694 = vmatpush1.msra.mxu0 0.0
    %695 = vmatprep.subr.mxu0 0.0
    %696 = vmatpush1.msra.mxu0 0.0
    %697 = vmatprep.subr.mxu0 0.0
    %698 = vmatpush1.msra.mxu0 0.0
    %699 = vmatprep.subr.mxu0 0.0
    %700 = vmatpush1.msra.mxu0 0.0
    %701 = vmatprep.subr.mxu0 0.0
    %702 = vmatpush1.msra.mxu0 0.0
    %703 = vmatprep.subr.mxu0 0.0
    %704 = vmatpush1.msra.mxu0 0.0
    %705 = vmatprep.subr.mxu0 0.0
    %706 = vmatpush1.msra.mxu0 0.0
    %707 = vmatprep.subr.mxu0 0.0
    %708 = vmatpush1.msra.mxu0 0.0
    %709 = vmatprep.subr.mxu0 0.0
    %710 = vmatpush1.msra.mxu0 0.0
    %711 = vmatprep.subr.mxu0 0.0
    %712 = vmatpush1.msra.mxu0 0.0
    %713 = vmatprep.subr.mxu0 0.0
    %714 = vmatpush1.msra.mxu0 0.0
    %715 = vmatprep.subr.mxu0 0.0
    %716 = vmatpush1.msra.mxu0 0.0
    %717 = vmatprep.subr.mxu0 0.0
    %718 = vmatpush1.msra.mxu0 0.0
    %719 = vmatprep.subr.mxu0 0.0
    %720 = vmatpush1.msra.mxu0 0.0
    %721 = vmatprep.subr.mxu0 0.0
    %722 = vmatpush1.msra.mxu0 0.0
    %723 = vmatprep.subr.mxu0 0.0
    %724 = vmatpush1.msra.mxu0 0.0
    %725 = vmatprep.subr.mxu0 0.0
    %726 = vmatpush1.msra.mxu0 0.0
    %727 = vmatprep.subr.mxu0 0.0
    %728 = vmatpush1.msra.mxu0 0.0
    %729 = vmatprep.subr.mxu0 0.0
    %730 = vmatpush1.msra.mxu0 0.0
    %731 = vmatprep.subr.mxu0 0.0
    %732 = vmatpush1.msra.mxu0 0.0
    %733 = vmatprep.subr.mxu0 0.0
    %734 = vmatpush1.msra.mxu0 0.0
    %735 = vmatprep.subr.mxu0 0.0
    %736 = vmatpush1.msra.mxu0 0.0
    %737 = vmatprep.subr.mxu0 0.0
    %738 = vmatpush1.msra.mxu0 0.0
    %739 = vmatprep.subr.mxu0 0.0
    %740 = vmatpush1.msra.mxu0 0.0
    %741 = vmatprep.subr.mxu0 0.0
    %742 = vmatpush1.msra.mxu0 0.0
    %743 = vmatprep.mubr.f32.mxu0 0.0
    %744 = vmatmul.mubr.f32.gmra.mrb[0].mxu0 %v677
    %v745 = vpop.f32.mrb[0].mxu0
    %v746 = vadd.f32 %v675, %v745
    %v747 = vpop.f32.mrb[0].mxu0
    %748 = vdwg.mxu0
    %749 = vst.msk [vmem:[#allocation10] sm:$0xff] %vm71, %v746
    // Predicated region
    $region34: #{tpu_custom_call.1} parent=1 // pred_check
      _
    $region35: #{tpu_custom_call.1} parent=1 // pred_check_branch
      %751 = sbr.rel (0) target = $region37
    $region36: #{tpu_custom_call.1} parent=1 // pred_region
      %s753 = ssub.s32 128, 128
      %754 = vsyncadd [#allocation4], %s753
      %s756 = sshll.u32 [#allocation10], 4
      %s757 = int_to_ptr.vmem [resolvable:$true] %s756
      %759 = dma.vmem_to_hbm [thread:$0]  %s757, 128, %s4, [#allocation4]
    $region37: #{tpu_custom_call.1} parent=1 // pred_fallthru
      _
    // Predicated region
    $region38: #{tpu_custom_call.1} parent=1 // pred_check
      _
    $region39: #{tpu_custom_call.1} parent=1 // pred_check_branch
      %761 = sbr.rel (0) target = $region41
    $region40: #{tpu_custom_call.1} parent=1 // pred_region
      %762 = dma.done [#allocation4], 128
    $region41: #{tpu_custom_call.1} parent=1 // pred_fallthru
      _
    %763 = vsyncpa [#allocation3], 1
    %764 = vsyncpa [#allocation6], 1
    %765 = vsyncpa [#allocation9], 1
    %766 = vsyncpa [#allocation4], 1

</llo_original>
